<compile_context>
chip_gen: v6e
topology: v6e:2x2x1
jax: 0.10.0
libtpu: 0.0.40
codegen_flags: <defaults>
</compile_context>

<pallas_src>
import jax
import jax.numpy as jnp
from jax import lax
from jax.experimental import pallas as pl
from jax.experimental.pallas import tpu as pltpu

NEG_SLOPE = 0.01   # torch.nn.LeakyReLU default
LANE = 128
PAD8 = 8           # sublane group: rows of the bias / W5^T / output stacks


def _round_up(x, m):
    return (x + m - 1) // m * m


def discriminator_kernel(x_ref, w1_ref, wh_ref, w5t_ref, b_ref, out_ref):
    """One batch tile of the 5-layer MLP.

    x_ref:   (TB, in_feat)  compute dtype (bf16/f32), raw input rows
    w1_ref:  (in_feat, F)   compute dtype, first-layer weight (resident)
    wh_ref:  (3, F, F)      compute dtype, hidden weights W2..W4 (resident)
    w5t_ref: (8, F)         compute dtype, row 0 = W5 column, rows 1..7 zero
    b_ref:   (8, F)         float32, rows 0..3 = b1..b4, b_ref[4,0] = b5
    out_ref: (8, TB)        float32, row 0 = validity scores for this tile
    """
    b_all = b_ref[...]                                   # (8, F) f32, loaded once

    # Layer 1: (TB, in_feat) @ (in_feat, F) with K = in_feat (no padded input).
    z = jnp.dot(x_ref[...], w1_ref[...], preferred_element_type=jnp.float32)
    z = z + b_all[0:1, :]
    z = jnp.maximum(z, NEG_SLOPE * z)                    # LeakyReLU, f32 epilogue
    h = z.astype(x_ref.dtype)

    # Hidden layers 2..4 (full MXU tiles, f32 accumulation).
    for l in range(wh_ref.shape[0]):
        z = jnp.dot(h, wh_ref[l], preferred_element_type=jnp.float32)
        z = z + b_all[l + 1:l + 2, :]
        z = jnp.maximum(z, NEG_SLOPE * z)
        h = z.astype(x_ref.dtype)

    # Head, computed transposed on the MXU:
    #   (8, F) x (TB, F) contracting the feature dim -> (8, TB), row 0 useful.
    head = lax.dot_general(
        w5t_ref[...], h,
        dimension_numbers=(((1,), (1,)), ((), ())),
        preferred_element_type=jnp.float32)
    out_ref[...] = head + b_all[4:5, 0:1]                # b5 broadcast add (f32)


def pack_params(params, compute_dtype, F):
    """Pad/stack parameters for the kernel layout described above."""
    in_feat = params["w1"].shape[0]
    latent = params["w2"].shape[0]

    w1 = jnp.zeros((in_feat, F), jnp.float32).at[:, :latent].set(params["w1"])

    wh = jnp.zeros((3, F, F), jnp.float32)
    for i, name in enumerate(("w2", "w3", "w4")):
        wh = wh.at[i, :latent, :latent].set(params[name])

    w5t = jnp.zeros((PAD8, F), jnp.float32).at[0, :latent].set(params["w5"][:, 0])

    b = jnp.zeros((PAD8, F), jnp.float32)
    for i, name in enumerate(("b1", "b2", "b3", "b4")):
        b = b.at[i, :latent].set(params[name].reshape(-1))
    b = b.at[4, 0].set(params["b5"].reshape(()))

    return (w1.astype(compute_dtype), wh.astype(compute_dtype),
            w5t.astype(compute_dtype), b)


def _dense_reference(lv, p):
    """Plain-XLA forward (also the small-batch bypass path)."""
    h = lv
    for l in range(1, 5):
        h = h @ p[f"w{l}"] + p[f"b{l}"]
        h = jnp.where(h > 0, h, NEG_SLOPE * h)
    return h @ p["w5"] + p["b5"]


def discriminator_forward(lv, params, *, compute_dtype=jnp.bfloat16,
                          block_b=1024, use_pallas=None):
    """lv: (B, in_feat). Returns validity (B, 1) in float32."""
    B, in_feat = lv.shape
    latent = params["w2"].shape[0]

    # Small-batch bypass: below ~2 tiles of rows the kernel is pure launch +
    # padding overhead, so just run the 5 matmuls as plain XLA ops.
    if use_pallas is None:
        use_pallas = B >= 256
    if not use_pallas:
        return _dense_reference(lv.astype(jnp.float32), params).astype(jnp.float32)

    F = _round_up(max(latent, LANE), LANE)
    w1, wh, w5t, bb = pack_params(params, compute_dtype, F)

    # Batch tile: multiple of 128 lanes (keeps the transposed (8, TB) output
    # block lane-dense), at most block_b, and split into >= 2 tiles whenever
    # B > 256 so the "parallel" batch axis can spread over v7x's 2 TensorCores.
    TB = min(block_b, _round_up(B, LANE))
    if B > 2 * LANE:
        TB = min(TB, _round_up(pl.cdiv(B, 2), LANE))
    B_pad = _round_up(B, TB)
    num_tiles = B_pad // TB

    x = lv.astype(compute_dtype)
    if B_pad != B:                      # pad only the batch dim (in_feat-wide)
        x = jnp.pad(x, ((0, B_pad - B), (0, 0)))

    itemsize = jnp.dtype(compute_dtype).itemsize
    cost = pl.CostEstimate(
        flops=2 * B_pad * (in_feat * F + 3 * F * F + F * PAD8),
        transcendentals=0,
        bytes_accessed=(B_pad * in_feat * itemsize
                        + (in_feat * F + 3 * F * F + PAD8 * F) * itemsize
                        + PAD8 * F * 4
                        + PAD8 * B_pad * 4),
    )

    out = pl.pallas_call(
        discriminator_kernel,
        out_shape=jax.ShapeDtypeStruct((PAD8, B_pad), jnp.float32),
        grid=(num_tiles,),
        in_specs=[
            pl.BlockSpec((TB, in_feat), lambda i: (i, 0)),     # activations: batch-tiled
            pl.BlockSpec((in_feat, F), lambda i: (0, 0)),      # W1: resident
            pl.BlockSpec((3, F, F), lambda i: (0, 0, 0)),      # W2..W4: resident
            pl.BlockSpec((PAD8, F), lambda i: (0, 0)),         # W5^T: resident
            pl.BlockSpec((PAD8, F), lambda i: (0, 0)),         # biases: resident
        ],
        out_specs=pl.BlockSpec((PAD8, TB), lambda i: (0, i)),  # lane-dense (8, TB)
        compiler_params=pltpu.CompilerParams(
            dimension_semantics=("parallel",),                 # batch tiles over TCs
            vmem_limit_bytes=32 * 1024 * 1024,
        ),
        cost_estimate=cost,
    )(x, w1, wh, w5t, bb)

    # Validity is row 0 of the transposed output.
    return out[0, :B].reshape(B, 1)


def init_params(key, in_feat, latent):
    """Deterministic init mimicking torch.nn.Linear (uniform +-1/sqrt(fan_in)).

    Weights stored (in_features, out_features), i.e. transpose of torch layout.
    """
    def linear(k, fan_in, fan_out):
        kw, kb = jax.random.split(k)
        bound = 1.0 / jnp.sqrt(jnp.float32(fan_in))
        w = jax.random.uniform(kw, (fan_in, fan_out), jnp.float32, -bound, bound)
        b = jax.random.uniform(kb, (1, fan_out), jnp.float32, -bound, bound)
        return w, b

    keys = jax.random.split(key, 5)
    w1, b1 = linear(keys[0], in_feat, latent)
    w2, b2 = linear(keys[1], latent, latent)
    w3, b3 = linear(keys[2], latent, latent)
    w4, b4 = linear(keys[3], latent, latent)
    w5, b5 = linear(keys[4], latent, 1)
    return dict(w1=w1, b1=b1, w2=w2, b2=b2, w3=w3, b3=b3,
                w4=w4, b4=b4, w5=w5, b5=b5)


if __name__ == "__main__":
    B, IN_FEAT, LATENT = 8, 4, 32

    key = jax.random.PRNGKey(0)
    k_x, k_x2, k_p = jax.random.split(key, 3)
    lv = jax.random.normal(k_x, (B, IN_FEAT), jnp.float32)
    params = init_params(k_p, IN_FEAT, LATENT)

    ref = _dense_reference(lv, params)

    # f32 compute path through the Pallas kernel (single tile): tight check.
    val_f32 = discriminator_forward(lv, params, compute_dtype=jnp.float32,
                                    use_pallas=True)
    jax.block_until_ready(val_f32)
    assert val_f32.shape == (B, 1)
    assert jnp.allclose(val_f32, ref, atol=1e-3, rtol=1e-3)

    # bf16 compute path (v6e/v7x MXU fast path): loose numerical check.
    val_bf16 = discriminator_forward(lv, params, use_pallas=True)
    jax.block_until_ready(val_bf16)
    assert val_bf16.shape == (B, 1)
    assert jnp.allclose(val_bf16, ref, atol=5e-2, rtol=5e-2)

    # Auto path at tiny batch uses the plain-XLA bypass.
    val_auto = discriminator_forward(lv, params)
    jax.block_until_ready(val_auto)
    assert jnp.allclose(val_auto, ref, atol=1e-3, rtol=1e-3)

    # Larger batch exercising a multi-tile grid (2 tiles -> both v7x TCs).
    B2 = 512
    lv2 = jax.random.normal(k_x2, (B2, IN_FEAT), jnp.float32)
    ref2 = _dense_reference(lv2, params)
    val2 = discriminator_forward(lv2, params, use_pallas=True)
    jax.block_until_ready(val2)
    assert val2.shape == (B2, 1)
    assert jnp.allclose(val2, ref2, atol=5e-2, rtol=5e-2)

    print("KERNEL_OK")
</pallas_src>

<mosaic_0001>
module attributes {stable_mosaic.version = 11 : i64} {
  func.func @discriminator_kernel(%arg0: i32, %arg1: memref<128x4xf32, #tpu.memory_space<vmem>>, %arg2: memref<4x128xf32, #tpu.memory_space<vmem>>, %arg3: memref<3x128x128xf32, #tpu.memory_space<vmem>>, %arg4: memref<8x128xf32, #tpu.memory_space<vmem>>, %arg5: memref<8x128xf32, #tpu.memory_space<vmem>>, %arg6: memref<8x128xf32, #tpu.memory_space<vmem>>) attributes {dimension_semantics = [#tpu.dimension_semantics<parallel>], iteration_bounds = array<i64: 1>, scalar_prefetch = 0 : i64, scratch_operands = 0 : i64, tpu.core_type = #tpu.core_type<tc>, window_params = [{transform_indices = @transform_0, window_bounds = array<i64: 128, 4>}, {pipeline_mode = #tpu.pipeline_mode<synchronous>, transform_indices = @transform_1, window_bounds = array<i64: 4, 128>}, {pipeline_mode = #tpu.pipeline_mode<synchronous>, transform_indices = @transform_2, window_bounds = array<i64: 3, 128, 128>}, {pipeline_mode = #tpu.pipeline_mode<synchronous>, transform_indices = @transform_3, window_bounds = array<i64: 8, 128>}, {pipeline_mode = #tpu.pipeline_mode<synchronous>, transform_indices = @transform_4, window_bounds = array<i64: 8, 128>}, {transform_indices = @transform_5, window_bounds = array<i64: 8, 128>}]} {
    %c0 = arith.constant 0 : index
    %c0_0 = arith.constant 0 : index
    %0 = vector.load %arg5[%c0, %c0_0] : memref<8x128xf32, #tpu.memory_space<vmem>>, vector<8x128xf32>
    %c0_1 = arith.constant 0 : index
    %c0_2 = arith.constant 0 : index
    %1 = vector.load %arg1[%c0_1, %c0_2] : memref<128x4xf32, #tpu.memory_space<vmem>>, vector<128x4xf32>
    %c0_3 = arith.constant 0 : index
    %c0_4 = arith.constant 0 : index
    %2 = vector.load %arg2[%c0_3, %c0_4] : memref<4x128xf32, #tpu.memory_space<vmem>>, vector<4x128xf32>
    %cst = arith.constant dense<0.000000e+00> : vector<128x128xf32>
    %3 = tpu.matmul %1, %2, %cst {dimension_numbers = #tpu.dot_dimension_numbers<[1], [0], [0], [1], [0, 0, 1, 1], [], []>} : vector<128x4xf32>, vector<4x128xf32>, vector<128x128xf32> -> vector<128x128xf32>
    %4 = vector.extract_strided_slice %0 {offsets = [0, 0], sizes = [1, 128], strides = [1, 1]} : vector<8x128xf32> to vector<1x128xf32>
    %5 = vector.broadcast %4 : vector<1x128xf32> to vector<128x128xf32>
    %6 = arith.addf %3, %5 : vector<128x128xf32>
    %cst_5 = arith.constant 0.00999999977 : f32
    %7 = vector.broadcast %cst_5 : f32 to vector<128x128xf32>
    %8 = arith.mulf %7, %6 : vector<128x128xf32>
    %9 = arith.maximumf %6, %8 : vector<128x128xf32>
    %c0_6 = arith.constant 0 : index
    %c0_7 = arith.constant 0 : index
    %c0_8 = arith.constant 0 : index
    %10 = vector.load %arg3[%c0_6, %c0_7, %c0_8] : memref<3x128x128xf32, #tpu.memory_space<vmem>>, vector<1x128x128xf32>
    %11 = vector.shape_cast %10 : vector<1x128x128xf32> to vector<128x128xf32>
    %cst_9 = arith.constant dense<0.000000e+00> : vector<128x128xf32>
    %12 = tpu.matmul %9, %11, %cst_9 {dimension_numbers = #tpu.dot_dimension_numbers<[1], [0], [0], [1], [0, 0, 1, 1], [], []>} : vector<128x128xf32>, vector<128x128xf32>, vector<128x128xf32> -> vector<128x128xf32>
    %13 = vector.extract_strided_slice %0 {offsets = [1, 0], sizes = [1, 128], strides = [1, 1]} : vector<8x128xf32> to vector<1x128xf32>
    %14 = vector.broadcast %13 : vector<1x128xf32> to vector<128x128xf32>
    %15 = arith.addf %12, %14 : vector<128x128xf32>
    %cst_10 = arith.constant 0.00999999977 : f32
    %16 = vector.broadcast %cst_10 : f32 to vector<128x128xf32>
    %17 = arith.mulf %16, %15 : vector<128x128xf32>
    %18 = arith.maximumf %15, %17 : vector<128x128xf32>
    %c1 = arith.constant 1 : index
    %c0_11 = arith.constant 0 : index
    %c0_12 = arith.constant 0 : index
    %19 = vector.load %arg3[%c1, %c0_11, %c0_12] : memref<3x128x128xf32, #tpu.memory_space<vmem>>, vector<1x128x128xf32>
    %20 = vector.shape_cast %19 : vector<1x128x128xf32> to vector<128x128xf32>
    %cst_13 = arith.constant dense<0.000000e+00> : vector<128x128xf32>
    %21 = tpu.matmul %18, %20, %cst_13 {dimension_numbers = #tpu.dot_dimension_numbers<[1], [0], [0], [1], [0, 0, 1, 1], [], []>} : vector<128x128xf32>, vector<128x128xf32>, vector<128x128xf32> -> vector<128x128xf32>
    %22 = vector.extract_strided_slice %0 {offsets = [2, 0], sizes = [1, 128], strides = [1, 1]} : vector<8x128xf32> to vector<1x128xf32>
    %23 = vector.broadcast %22 : vector<1x128xf32> to vector<128x128xf32>
    %24 = arith.addf %21, %23 : vector<128x128xf32>
    %cst_14 = arith.constant 0.00999999977 : f32
    %25 = vector.broadcast %cst_14 : f32 to vector<128x128xf32>
    %26 = arith.mulf %25, %24 : vector<128x128xf32>
    %27 = arith.maximumf %24, %26 : vector<128x128xf32>
    %c2 = arith.constant 2 : index
    %c0_15 = arith.constant 0 : index
    %c0_16 = arith.constant 0 : index
    %28 = vector.load %arg3[%c2, %c0_15, %c0_16] : memref<3x128x128xf32, #tpu.memory_space<vmem>>, vector<1x128x128xf32>
    %29 = vector.shape_cast %28 : vector<1x128x128xf32> to vector<128x128xf32>
    %cst_17 = arith.constant dense<0.000000e+00> : vector<128x128xf32>
    %30 = tpu.matmul %27, %29, %cst_17 {dimension_numbers = #tpu.dot_dimension_numbers<[1], [0], [0], [1], [0, 0, 1, 1], [], []>} : vector<128x128xf32>, vector<128x128xf32>, vector<128x128xf32> -> vector<128x128xf32>
    %31 = vector.extract_strided_slice %0 {offsets = [3, 0], sizes = [1, 128], strides = [1, 1]} : vector<8x128xf32> to vector<1x128xf32>
    %32 = vector.broadcast %31 : vector<1x128xf32> to vector<128x128xf32>
    %33 = arith.addf %30, %32 : vector<128x128xf32>
    %cst_18 = arith.constant 0.00999999977 : f32
    %34 = vector.broadcast %cst_18 : f32 to vector<128x128xf32>
    %35 = arith.mulf %34, %33 : vector<128x128xf32>
    %36 = arith.maximumf %33, %35 : vector<128x128xf32>
    %c0_19 = arith.constant 0 : index
    %c0_20 = arith.constant 0 : index
    %37 = vector.load %arg4[%c0_19, %c0_20] : memref<8x128xf32, #tpu.memory_space<vmem>>, vector<8x128xf32>
    %cst_21 = arith.constant dense<0.000000e+00> : vector<8x128xf32>
    %38 = tpu.matmul %37, %36, %cst_21 {dimension_numbers = #tpu.dot_dimension_numbers<[1], [1], [0], [0], [0, 0, 1, 0], [], []>} : vector<8x128xf32>, vector<128x128xf32>, vector<8x128xf32> -> vector<8x128xf32>
    %39 = vector.extract_strided_slice %0 {offsets = [4, 0], sizes = [1, 1], strides = [1, 1]} : vector<8x128xf32> to vector<1x1xf32>
    %40 = vector.broadcast %39 : vector<1x1xf32> to vector<8x128xf32>
    %41 = arith.addf %38, %40 : vector<8x128xf32>
    %c0_22 = arith.constant 0 : index
    %c0_23 = arith.constant 0 : index
    %42 = vector.load %arg6[%c0_22, %c0_23] : memref<8x128xf32, #tpu.memory_space<vmem>>, vector<8x128xf32>
    tpu.vector_store %arg6[%c0_22, %c0_23], %41 {strides = array<i32>} : memref<8x128xf32, #tpu.memory_space<vmem>>, vector<8x128xf32>,
    return
  }
  func.func @transform_0(%arg0: i32) -> (i32, i32) {
    %c0_i32 = arith.constant 0 : i32
    %c0_i32_0 = arith.constant 0 : i32
    return %arg0, %c0_i32 : i32, i32
  }
  func.func @transform_1(%arg0: i32) -> (i32, i32) {
    %c0_i32 = arith.constant 0 : i32
    %c0_i32_0 = arith.constant 0 : i32
    %c0_i32_1 = arith.constant 0 : i32
    return %c0_i32, %c0_i32_0 : i32, i32
  }
  func.func @transform_2(%arg0: i32) -> (i32, i32, i32) {
    %c0_i32 = arith.constant 0 : i32
    %c0_i32_0 = arith.constant 0 : i32
    %c0_i32_1 = arith.constant 0 : i32
    %c0_i32_2 = arith.constant 0 : i32
    return %c0_i32, %c0_i32_0, %c0_i32_1 : i32, i32, i32
  }
  func.func @transform_3(%arg0: i32) -> (i32, i32) {
    %c0_i32 = arith.constant 0 : i32
    %c0_i32_0 = arith.constant 0 : i32
    %c0_i32_1 = arith.constant 0 : i32
    return %c0_i32, %c0_i32_0 : i32, i32
  }
  func.func @transform_4(%arg0: i32) -> (i32, i32) {
    %c0_i32 = arith.constant 0 : i32
    %c0_i32_0 = arith.constant 0 : i32
    %c0_i32_1 = arith.constant 0 : i32
    return %c0_i32, %c0_i32_0 : i32, i32
  }
  func.func @transform_5(%arg0: i32) -> (i32, i32) {
    %c0_i32 = arith.constant 0 : i32
    %c0_i32_0 = arith.constant 0 : i32
    return %c0_i32, %arg0 : i32, i32
  }
}

</mosaic_0001>

<llo_original>
// kernel: tpu_custom_call.1
$region0: #{tpu_custom_call.1}
  #allocation0 [shape = 'u32[]', space=smem, size = 0x4, offset = 0x4, fixed_abs, tag = 'smem constant byte address 0x4 - core index']
  #allocation1 [shape = 'u32[144,128]{1,0:T(1,128)}', space=vmem, size = 0x12000, scoped, tag = 'internal scratch']
  %s0 = inlined_call_operand.vmem [shape: f32[128,4], index: 0, kind: input, shape index: {}]
  %s1 = inlined_call_operand.vmem [shape: f32[4,128], index: 1, kind: input, shape index: {}]
  %s2 = inlined_call_operand.hbm [shape: f32[3,128,128], index: 2, kind: input, shape index: {}]
  %s3 = inlined_call_operand.vmem [shape: f32[8,128], index: 3, kind: input, shape index: {}]
  %s4 = inlined_call_operand.vmem [shape: f32[8,128], index: 4, kind: input, shape index: {}]
  %s5 = inlined_call_operand.hbm [shape: f32[8,128], index: 5, kind: output, shape index: {}]
  %s6 = sld [smem:[#allocation0]]
  $region34: #{tpu_custom_call.1} parent=0
    _
  %s8 = ssub.s32 1, %s6
  %s9 = scalar_select 0, %s8, %s6
  $region1: #{tpu_custom_call.1} parent=0
    #allocation2 [shape = 'u8[196608]{0}', space=vmem, size = 0x30000, scoped, tag = 'input window, operand 2, single buffered']
    #allocation3 [shape = 's32[1]{0}', space=sflag, size = 0x4, scoped, tag = 'scoped memory for tpu_custom_call.1']
    #allocation4 [shape = 's32[1]{0}', space=sflag, size = 0x4, scoped, tag = 'scoped memory for tpu_custom_call.1']
    #allocation5 [shape = 'u8[4096]{0}', space=vmem, size = 0x1000, scoped, tag = 'output window, operand 0, single buffered']
    %10 = vsyncpa [#allocation3], 0
    %11 = vsyncpa [#allocation4], 0
    // Predicated region
    $region2: #{tpu_custom_call.1} parent=1 // pred_check
      _
    $region3: #{tpu_custom_call.1} parent=1 // pred_check_branch
      %13 = sbr.rel (0) target = $region5
    $region4: #{tpu_custom_call.1} parent=1 // pred_region
      _
    $region5: #{tpu_custom_call.1} parent=1 // pred_fallthru
      _
    // Predicated region
    $region6: #{tpu_custom_call.1} parent=1 // pred_check
      _
    $region7: #{tpu_custom_call.1} parent=1 // pred_check_branch
      %15 = sbr.rel (0) target = $region9
    $region8: #{tpu_custom_call.1} parent=1 // pred_region
      _
    $region9: #{tpu_custom_call.1} parent=1 // pred_fallthru
      _
    // Predicated region
    $region10: #{tpu_custom_call.1} parent=1 // pred_check
      _
    $region11: #{tpu_custom_call.1} parent=1 // pred_check_branch
      %17 = sbr.rel (0) target = $region13
    $region12: #{tpu_custom_call.1} parent=1 // pred_region
      %s19 = ssub.s32 6144, 6144
      %20 = vsyncadd [#allocation3], %s19
      %s21 = sshll.u32 [#allocation2], 4
      %s22 = int_to_ptr.vmem [resolvable:$true] %s21
      %27 = dma.hbm_to_vmem [thread:$0]  %s2, 6144, %s22, [#allocation3], 128, 128, 8
    $region13: #{tpu_custom_call.1} parent=1 // pred_fallthru
      _
    // Predicated region
    $region14: #{tpu_custom_call.1} parent=1 // pred_check
      _
    $region15: #{tpu_custom_call.1} parent=1 // pred_check_branch
      %29 = sbr.rel (0) target = $region17
    $region16: #{tpu_custom_call.1} parent=1 // pred_region
      _
    $region17: #{tpu_custom_call.1} parent=1 // pred_fallthru
      _
    // Predicated region
    $region18: #{tpu_custom_call.1} parent=1 // pred_check
      _
    $region19: #{tpu_custom_call.1} parent=1 // pred_check_branch
      %31 = sbr.rel (0) target = $region21
    $region20: #{tpu_custom_call.1} parent=1 // pred_region
      _
    $region21: #{tpu_custom_call.1} parent=1 // pred_fallthru
      _
    // Predicated region
    $region22: #{tpu_custom_call.1} parent=1 // pred_check
      _
    $region23: #{tpu_custom_call.1} parent=1 // pred_check_branch
      %33 = sbr.rel (0) target = $region25
    $region24: #{tpu_custom_call.1} parent=1 // pred_region
      %34 = dma.done [#allocation3], 6144
    $region25: #{tpu_custom_call.1} parent=1 // pred_fallthru
      _
    %v35 = vld [vmem:[%s4] sm:$0xff]
    %v36 = vld [vmem:[%s0] sm:$0xff]
    %v37 = vld [vmem:[%s0 + $0x8] sm:$0xff]
    %v38 = vld [vmem:[%s0 + $0x10] sm:$0xff]
    %v39 = vld [vmem:[%s0 + $0x18] sm:$0xff]
    %v40 = vld [vmem:[%s0 + $0x20] sm:$0xff]
    %v41 = vld [vmem:[%s0 + $0x28] sm:$0xff]
    %v42 = vld [vmem:[%s0 + $0x30] sm:$0xff]
    %v43 = vld [vmem:[%s0 + $0x38] sm:$0xff]
    %v44 = vld [vmem:[%s0 + $0x40] sm:$0xff]
    %v45 = vld [vmem:[%s0 + $0x48] sm:$0xff]
    %v46 = vld [vmem:[%s0 + $0x50] sm:$0xff]
    %v47 = vld [vmem:[%s0 + $0x58] sm:$0xff]
    %v48 = vld [vmem:[%s0 + $0x60] sm:$0xff]
    %v49 = vld [vmem:[%s0 + $0x68] sm:$0xff]
    %v50 = vld [vmem:[%s0 + $0x70] sm:$0xff]
    %v51 = vld [vmem:[%s0 + $0x78] sm:$0xff]
    %v52 = vld [vmem:[%s1] sm:$0xf]
    %v53 = vlaneseq
    %v54 = vshrl.u32 %v53, 7
    %v55 = vsub.s32 0, %v54
    %v56 = vrot.slane %v35, %v55
    %vm57 = vcmask 31744
    %v59 = vsel %vm57, %v36, 0
    %v62 = vsel %vm57, %v37, 0
    %v65 = vsel %vm57, %v38, 0
    %v68 = vsel %vm57, %v39, 0
    %v71 = vsel %vm57, %v40, 0
    %v74 = vsel %vm57, %v41, 0
    %v77 = vsel %vm57, %v42, 0
    %v80 = vsel %vm57, %v43, 0
    %v83 = vsel %vm57, %v44, 0
    %v86 = vsel %vm57, %v45, 0
    %v89 = vsel %vm57, %v46, 0
    %v92 = vsel %vm57, %v47, 0
    %v95 = vsel %vm57, %v48, 0
    %v98 = vsel %vm57, %v49, 0
    %v101 = vsel %vm57, %v50, 0
    %v104 = vsel %vm57, %v51, 0
    %vm106 = vcmask 1043456
    %v108 = vsel %vm106, %v52, 0
    %110 = vmatprep.subr.mxu0 0.0
    %111 = vmatpush1.msra.mxu0 0.0
    %112 = vmatprep.subr.mxu0 0.0
    %113 = vmatpush1.msra.mxu0 0.0
    %114 = vmatprep.subr.mxu0 0.0
    %115 = vmatpush1.msra.mxu0 0.0
    %116 = vmatprep.subr.mxu0 0.0
    %117 = vmatpush1.msra.mxu0 0.0
    %118 = vmatprep.subr.mxu0 0.0
    %119 = vmatpush1.msra.mxu0 0.0
    %120 = vmatprep.subr.mxu0 0.0
    %121 = vmatpush1.msra.mxu0 0.0
    %122 = vmatprep.subr.mxu0 0.0
    %123 = vmatpush1.msra.mxu0 0.0
    %124 = vmatprep.subr.mxu0 0.0
    %125 = vmatpush1.msra.mxu0 0.0
    %126 = vmatprep.subr.mxu0 0.0
    %127 = vmatpush1.msra.mxu0 0.0
    %128 = vmatprep.subr.mxu0 0.0
    %129 = vmatpush1.msra.mxu0 0.0
    %130 = vmatprep.subr.mxu0 0.0
    %131 = vmatpush1.msra.mxu0 0.0
    %132 = vmatprep.subr.mxu0 0.0
    %133 = vmatpush1.msra.mxu0 0.0
    %134 = vmatprep.subr.mxu0 0.0
    %135 = vmatpush1.msra.mxu0 0.0
    %136 = vmatprep.subr.mxu0 0.0
    %137 = vmatpush1.msra.mxu0 0.0
    %138 = vmatprep.subr.mxu0 0.0
    %139 = vmatpush1.msra.mxu0 0.0
    %140 = vmatprep.subr.mxu0 0.0
    %141 = vmatpush1.msra.mxu0 %v108
    %142 = vmatprep.subr.mxu0 0.0
    %143 = vmatpush2.msra.mxu0 0.0
    %144 = vmatprep.subr.mxu0 0.0
    %145 = vmatpush2.msra.mxu0 0.0
    %146 = vmatprep.subr.mxu0 0.0
    %147 = vmatpush2.msra.mxu0 0.0
    %148 = vmatprep.subr.mxu0 0.0
    %149 = vmatpush2.msra.mxu0 0.0
    %150 = vmatprep.subr.mxu0 0.0
    %151 = vmatpush2.msra.mxu0 0.0
    %152 = vmatprep.subr.mxu0 0.0
    %153 = vmatpush2.msra.mxu0 0.0
    %154 = vmatprep.subr.mxu0 0.0
    %155 = vmatpush2.msra.mxu0 0.0
    %156 = vmatprep.subr.mxu0 0.0
    %157 = vmatpush2.msra.mxu0 0.0
    %158 = vmatprep.subr.mxu0 0.0
    %159 = vmatpush2.msra.mxu0 0.0
    %160 = vmatprep.subr.mxu0 0.0
    %161 = vmatpush2.msra.mxu0 0.0
    %162 = vmatprep.subr.mxu0 0.0
    %163 = vmatpush2.msra.mxu0 0.0
    %164 = vmatprep.subr.mxu0 0.0
    %165 = vmatpush2.msra.mxu0 0.0
    %166 = vmatprep.subr.mxu0 0.0
    %167 = vmatpush2.msra.mxu0 0.0
    %168 = vmatprep.subr.mxu0 0.0
    %169 = vmatpush2.msra.mxu0 0.0
    %170 = vmatprep.subr.mxu0 0.0
    %171 = vmatpush2.msra.mxu0 0.0
    %172 = vmatprep.subr.mxu0 0.0
    %173 = vmatpush2.msra.mxu0 0.0
    %174 = vmatprep.mubr.f32.mxu0 0.0
    %175 = vmatmul.mubr.f32.gmra.mxu0 %v59
    %v176 = vpop.f32.mrf.mxu0
    %v177 = vadd.f32 %v56, %v176
    %v178 = vpop.f32.mrf.mxu0
    %179 = vmatprep.mubr.f32.mxu0 0.0
    %180 = vmatmul.mubr.f32.gmra.mxu0 %v62
    %v181 = vpop.f32.mrf.mxu0
    %v182 = vadd.f32 %v56, %v181
    %v183 = vpop.f32.mrf.mxu0
    %184 = vmatprep.mubr.f32.mxu0 0.0
    %185 = vmatmul.mubr.f32.gmra.mxu0 %v65
    %v186 = vpop.f32.mrf.mxu0
    %v187 = vadd.f32 %v56, %v186
    %v188 = vpop.f32.mrf.mxu0
    %189 = vmatprep.mubr.f32.mxu0 0.0
    %190 = vmatmul.mubr.f32.gmra.mxu0 %v68
    %v191 = vpop.f32.mrf.mxu0
    %v192 = vadd.f32 %v56, %v191
    %v193 = vpop.f32.mrf.mxu0
    %194 = vmatprep.mubr.f32.mxu0 0.0
    %195 = vmatmul.mubr.f32.gmra.mxu0 %v71
    %v196 = vpop.f32.mrf.mxu0
    %v197 = vadd.f32 %v56, %v196
    %v198 = vpop.f32.mrf.mxu0
    %199 = vmatprep.mubr.f32.mxu0 0.0
    %200 = vmatmul.mubr.f32.gmra.mxu0 %v74
    %v201 = vpop.f32.mrf.mxu0
    %v202 = vadd.f32 %v56, %v201
    %v203 = vpop.f32.mrf.mxu0
    %204 = vmatprep.mubr.f32.mxu0 0.0
    %205 = vmatmul.mubr.f32.gmra.mxu0 %v77
    %v206 = vpop.f32.mrf.mxu0
    %v207 = vadd.f32 %v56, %v206
    %v208 = vpop.f32.mrf.mxu0
    %209 = vmatprep.mubr.f32.mxu0 0.0
    %210 = vmatmul.mubr.f32.gmra.mxu0 %v80
    %v211 = vpop.f32.mrf.mxu0
    %v212 = vadd.f32 %v56, %v211
    %v213 = vpop.f32.mrf.mxu0
    %214 = vmatprep.mubr.f32.mxu0 0.0
    %215 = vmatmul.mubr.f32.gmra.mxu0 %v83
    %v216 = vpop.f32.mrf.mxu0
    %v217 = vadd.f32 %v56, %v216
    %v218 = vpop.f32.mrf.mxu0
    %219 = vmatprep.mubr.f32.mxu0 0.0
    %220 = vmatmul.mubr.f32.gmra.mxu0 %v86
    %v221 = vpop.f32.mrf.mxu0
    %v222 = vadd.f32 %v56, %v221
    %v223 = vpop.f32.mrf.mxu0
    %224 = vmatprep.mubr.f32.mxu0 0.0
    %225 = vmatmul.mubr.f32.gmra.mxu0 %v89
    %v226 = vpop.f32.mrf.mxu0
    %v227 = vadd.f32 %v56, %v226
    %v228 = vpop.f32.mrf.mxu0
    %229 = vmatprep.mubr.f32.mxu0 0.0
    %230 = vmatmul.mubr.f32.gmra.mxu0 %v92
    %v231 = vpop.f32.mrf.mxu0
    %v232 = vadd.f32 %v56, %v231
    %v233 = vpop.f32.mrf.mxu0
    %234 = vmatprep.mubr.f32.mxu0 0.0
    %235 = vmatmul.mubr.f32.gmra.mxu0 %v95
    %v236 = vpop.f32.mrf.mxu0
    %v237 = vadd.f32 %v56, %v236
    %v238 = vpop.f32.mrf.mxu0
    %239 = vmatprep.mubr.f32.mxu0 0.0
    %240 = vmatmul.mubr.f32.gmra.mxu0 %v98
    %v241 = vpop.f32.mrf.mxu0
    %v242 = vadd.f32 %v56, %v241
    %v243 = vpop.f32.mrf.mxu0
    %244 = vmatprep.mubr.f32.mxu0 0.0
    %245 = vmatmul.mubr.f32.gmra.mxu0 %v101
    %v246 = vpop.f32.mrf.mxu0
    %v247 = vadd.f32 %v56, %v246
    %v248 = vpop.f32.mrf.mxu0
    %249 = vmatprep.mubr.f32.mxu0 0.0
    %250 = vmatmul.mubr.f32.gmra.mxu0 %v104
    %v251 = vpop.f32.mrf.mxu0
    %v252 = vadd.f32 %v56, %v251
    %v253 = vpop.f32.mrf.mxu0
    %254 = vdwg.mxu0
    %v255 = vmul.f32 %v177, 0.01
    %v256 = vmul.f32 %v182, 0.01
    %v257 = vmul.f32 %v187, 0.01
    %v258 = vmul.f32 %v192, 0.01
    %v259 = vmul.f32 %v197, 0.01
    %v260 = vmul.f32 %v202, 0.01
    %v261 = vmul.f32 %v207, 0.01
    %v262 = vmul.f32 %v212, 0.01
    %v263 = vmul.f32 %v217, 0.01
    %v264 = vmul.f32 %v222, 0.01
    %v265 = vmul.f32 %v227, 0.01
    %v266 = vmul.f32 %v232, 0.01
    %v267 = vmul.f32 %v237, 0.01
    %v268 = vmul.f32 %v242, 0.01
    %v269 = vmul.f32 %v247, 0.01
    %v270 = vmul.f32 %v252, 0.01
    %v271 = vmax.f32 %v177, %v255
    %v272 = vmax.f32 %v182, %v256
    %v273 = vmax.f32 %v187, %v257
    %v274 = vmax.f32 %v192, %v258
    %v275 = vmax.f32 %v197, %v259
    %v276 = vmax.f32 %v202, %v260
    %v277 = vmax.f32 %v207, %v261
    %v278 = vmax.f32 %v212, %v262
    %v279 = vmax.f32 %v217, %v263
    %v280 = vmax.f32 %v222, %v264
    %v281 = vmax.f32 %v227, %v265
    %v282 = vmax.f32 %v232, %v266
    %v283 = vmax.f32 %v237, %v267
    %v284 = vmax.f32 %v242, %v268
    %v285 = vmax.f32 %v247, %v269
    %v286 = vmax.f32 %v252, %v270
    %v287 = vld [vmem:[#allocation2] sm:$0xff]
    %v288 = vld [vmem:[#allocation2 + $0x8] sm:$0xff]
    %v289 = vld [vmem:[#allocation2 + $0x10] sm:$0xff]
    %v290 = vld [vmem:[#allocation2 + $0x18] sm:$0xff]
    %v291 = vld [vmem:[#allocation2 + $0x20] sm:$0xff]
    %v292 = vld [vmem:[#allocation2 + $0x28] sm:$0xff]
    %v293 = vld [vmem:[#allocation2 + $0x30] sm:$0xff]
    %v294 = vld [vmem:[#allocation2 + $0x38] sm:$0xff]
    %v295 = vld [vmem:[#allocation2 + $0x40] sm:$0xff]
    %v296 = vld [vmem:[#allocation2 + $0x48] sm:$0xff]
    %v297 = vld [vmem:[#allocation2 + $0x50] sm:$0xff]
    %v298 = vld [vmem:[#allocation2 + $0x58] sm:$0xff]
    %v299 = vld [vmem:[#allocation2 + $0x60] sm:$0xff]
    %v300 = vld [vmem:[#allocation2 + $0x68] sm:$0xff]
    %v301 = vld [vmem:[#allocation2 + $0x70] sm:$0xff]
    %v302 = vld [vmem:[#allocation2 + $0x78] sm:$0xff]
    %v303 = vlaneseq
    %v304 = vshrl.u32 %v303, 7
    %v305 = vsub.s32 1, %v304
    %v306 = vrot.slane %v35, %v305
    %307 = vmatprep.subr.mxu0 0.0
    %308 = vmatpush1.msra.mxu0 %v302
    %309 = vmatprep.subr.mxu0 0.0
    %310 = vmatpush1.msra.mxu0 %v301
    %311 = vmatprep.subr.mxu0 0.0
    %312 = vmatpush1.msra.mxu0 %v300
    %313 = vmatprep.subr.mxu0 0.0
    %314 = vmatpush1.msra.mxu0 %v299
    %315 = vmatprep.subr.mxu0 0.0
    %316 = vmatpush1.msra.mxu0 %v298
    %317 = vmatprep.subr.mxu0 0.0
    %318 = vmatpush1.msra.mxu0 %v297
    %319 = vmatprep.subr.mxu0 0.0
    %320 = vmatpush1.msra.mxu0 %v296
    %321 = vmatprep.subr.mxu0 0.0
    %322 = vmatpush1.msra.mxu0 %v295
    %323 = vmatprep.subr.mxu0 0.0
    %324 = vmatpush1.msra.mxu0 %v294
    %325 = vmatprep.subr.mxu0 0.0
    %326 = vmatpush1.msra.mxu0 %v293
    %327 = vmatprep.subr.mxu0 0.0
    %328 = vmatpush1.msra.mxu0 %v292
    %329 = vmatprep.subr.mxu0 0.0
    %330 = vmatpush1.msra.mxu0 %v291
    %331 = vmatprep.subr.mxu0 0.0
    %332 = vmatpush1.msra.mxu0 %v290
    %333 = vmatprep.subr.mxu0 0.0
    %334 = vmatpush1.msra.mxu0 %v289
    %335 = vmatprep.subr.mxu0 0.0
    %336 = vmatpush1.msra.mxu0 %v288
    %337 = vmatprep.subr.mxu0 0.0
    %338 = vmatpush1.msra.mxu0 %v287
    %339 = vmatprep.subr.mxu0 0.0
    %340 = vmatpush2.msra.mxu0 0.0
    %341 = vmatprep.subr.mxu0 0.0
    %342 = vmatpush2.msra.mxu0 0.0
    %343 = vmatprep.subr.mxu0 0.0
    %344 = vmatpush2.msra.mxu0 0.0
    %345 = vmatprep.subr.mxu0 0.0
    %346 = vmatpush2.msra.mxu0 0.0
    %347 = vmatprep.subr.mxu0 0.0
    %348 = vmatpush2.msra.mxu0 0.0
    %349 = vmatprep.subr.mxu0 0.0
    %350 = vmatpush2.msra.mxu0 0.0
    %351 = vmatprep.subr.mxu0 0.0
    %352 = vmatpush2.msra.mxu0 0.0
    %353 = vmatprep.subr.mxu0 0.0
    %354 = vmatpush2.msra.mxu0 0.0
    %355 = vmatprep.subr.mxu0 0.0
    %356 = vmatpush2.msra.mxu0 0.0
    %357 = vmatprep.subr.mxu0 0.0
    %358 = vmatpush2.msra.mxu0 0.0
    %359 = vmatprep.subr.mxu0 0.0
    %360 = vmatpush2.msra.mxu0 0.0
    %361 = vmatprep.subr.mxu0 0.0
    %362 = vmatpush2.msra.mxu0 0.0
    %363 = vmatprep.subr.mxu0 0.0
    %364 = vmatpush2.msra.mxu0 0.0
    %365 = vmatprep.subr.mxu0 0.0
    %366 = vmatpush2.msra.mxu0 0.0
    %367 = vmatprep.subr.mxu0 0.0
    %368 = vmatpush2.msra.mxu0 0.0
    %369 = vmatprep.subr.mxu0 0.0
    %370 = vmatpush2.msra.mxu0 0.0
    %371 = vmatprep.mubr.f32.mxu0 0.0
    %372 = vmatmul.mubr.f32.gmra.mxu0 %v271
    %v373 = vpop.f32.mrf.mxu0
    %v374 = vadd.f32 %v306, %v373
    %v375 = vpop.f32.mrf.mxu0
    %376 = vmatprep.mubr.f32.mxu0 0.0
    %377 = vmatmul.mubr.f32.gmra.mxu0 %v272
    %v378 = vpop.f32.mrf.mxu0
    %v379 = vadd.f32 %v306, %v378
    %v380 = vpop.f32.mrf.mxu0
    %381 = vmatprep.mubr.f32.mxu0 0.0
    %382 = vmatmul.mubr.f32.gmra.mxu0 %v273
    %v383 = vpop.f32.mrf.mxu0
    %v384 = vadd.f32 %v306, %v383
    %v385 = vpop.f32.mrf.mxu0
    %386 = vmatprep.mubr.f32.mxu0 0.0
    %387 = vmatmul.mubr.f32.gmra.mxu0 %v274
    %v388 = vpop.f32.mrf.mxu0
    %v389 = vadd.f32 %v306, %v388
    %v390 = vpop.f32.mrf.mxu0
    %391 = vmatprep.mubr.f32.mxu0 0.0
    %392 = vmatmul.mubr.f32.gmra.mxu0 %v275
    %v393 = vpop.f32.mrf.mxu0
    %v394 = vadd.f32 %v306, %v393
    %v395 = vpop.f32.mrf.mxu0
    %396 = vmatprep.mubr.f32.mxu0 0.0
    %397 = vmatmul.mubr.f32.gmra.mxu0 %v276
    %v398 = vpop.f32.mrf.mxu0
    %v399 = vadd.f32 %v306, %v398
    %v400 = vpop.f32.mrf.mxu0
    %401 = vmatprep.mubr.f32.mxu0 0.0
    %402 = vmatmul.mubr.f32.gmra.mxu0 %v277
    %v403 = vpop.f32.mrf.mxu0
    %v404 = vadd.f32 %v306, %v403
    %v405 = vpop.f32.mrf.mxu0
    %406 = vmatprep.mubr.f32.mxu0 0.0
    %407 = vmatmul.mubr.f32.gmra.mxu0 %v278
    %v408 = vpop.f32.mrf.mxu0
    %v409 = vadd.f32 %v306, %v408
    %v410 = vpop.f32.mrf.mxu0
    %411 = vmatprep.mubr.f32.mxu0 0.0
    %412 = vmatmul.mubr.f32.gmra.mxu0 %v279
    %v413 = vpop.f32.mrf.mxu0
    %v414 = vadd.f32 %v306, %v413
    %v415 = vpop.f32.mrf.mxu0
    %416 = vmatprep.mubr.f32.mxu0 0.0
    %417 = vmatmul.mubr.f32.gmra.mxu0 %v280
    %v418 = vpop.f32.mrf.mxu0
    %v419 = vadd.f32 %v306, %v418
    %v420 = vpop.f32.mrf.mxu0
    %421 = vmatprep.mubr.f32.mxu0 0.0
    %422 = vmatmul.mubr.f32.gmra.mxu0 %v281
    %v423 = vpop.f32.mrf.mxu0
    %v424 = vadd.f32 %v306, %v423
    %v425 = vpop.f32.mrf.mxu0
    %426 = vmatprep.mubr.f32.mxu0 0.0
    %427 = vmatmul.mubr.f32.gmra.mxu0 %v282
    %v428 = vpop.f32.mrf.mxu0
    %v429 = vadd.f32 %v306, %v428
    %v430 = vpop.f32.mrf.mxu0
    %431 = vmatprep.mubr.f32.mxu0 0.0
    %432 = vmatmul.mubr.f32.gmra.mxu0 %v283
    %v433 = vpop.f32.mrf.mxu0
    %v434 = vadd.f32 %v306, %v433
    %v435 = vpop.f32.mrf.mxu0
    %436 = vmatprep.mubr.f32.mxu0 0.0
    %437 = vmatmul.mubr.f32.gmra.mxu0 %v284
    %v438 = vpop.f32.mrf.mxu0
    %v439 = vadd.f32 %v306, %v438
    %v440 = vpop.f32.mrf.mxu0
    %441 = vmatprep.mubr.f32.mxu0 0.0
    %442 = vmatmul.mubr.f32.gmra.mxu0 %v285
    %v443 = vpop.f32.mrf.mxu0
    %v444 = vadd.f32 %v306, %v443
    %v445 = vpop.f32.mrf.mxu0
    %446 = vmatprep.mubr.f32.mxu0 0.0
    %447 = vmatmul.mubr.f32.gmra.mxu0 %v286
    %v448 = vpop.f32.mrf.mxu0
    %v449 = vadd.f32 %v306, %v448
    %v450 = vpop.f32.mrf.mxu0
    %451 = vdwg.mxu0
    %v452 = vmul.f32 %v374, 0.01
    %v453 = vmul.f32 %v379, 0.01
    %v454 = vmul.f32 %v384, 0.01
    %v455 = vmul.f32 %v389, 0.01
    %v456 = vmul.f32 %v394, 0.01
    %v457 = vmul.f32 %v399, 0.01
    %v458 = vmul.f32 %v404, 0.01
    %v459 = vmul.f32 %v409, 0.01
    %v460 = vmul.f32 %v414, 0.01
    %v461 = vmul.f32 %v419, 0.01
    %v462 = vmul.f32 %v424, 0.01
    %v463 = vmul.f32 %v429, 0.01
    %v464 = vmul.f32 %v434, 0.01
    %v465 = vmul.f32 %v439, 0.01
    %v466 = vmul.f32 %v444, 0.01
    %v467 = vmul.f32 %v449, 0.01
    %v468 = vmax.f32 %v374, %v452
    %v469 = vmax.f32 %v379, %v453
    %v470 = vmax.f32 %v384, %v454
    %v471 = vmax.f32 %v389, %v455
    %v472 = vmax.f32 %v394, %v456
    %v473 = vmax.f32 %v399, %v457
    %v474 = vmax.f32 %v404, %v458
    %v475 = vmax.f32 %v409, %v459
    %v476 = vmax.f32 %v414, %v460
    %v477 = vmax.f32 %v419, %v461
    %v478 = vmax.f32 %v424, %v462
    %v479 = vmax.f32 %v429, %v463
    %v480 = vmax.f32 %v434, %v464
    %v481 = vmax.f32 %v439, %v465
    %v482 = vmax.f32 %v444, %v466
    %v483 = vmax.f32 %v449, %v467
    %s484 = scalar_lea.vmem [#allocation2], 128
    %v485 = vld [vmem:[%s484] sm:$0xff]
    %v486 = vld [vmem:[%s484 + $0x8] sm:$0xff]
    %v487 = vld [vmem:[%s484 + $0x10] sm:$0xff]
    %v488 = vld [vmem:[%s484 + $0x18] sm:$0xff]
    %v489 = vld [vmem:[%s484 + $0x20] sm:$0xff]
    %v490 = vld [vmem:[%s484 + $0x28] sm:$0xff]
    %v491 = vld [vmem:[%s484 + $0x30] sm:$0xff]
    %v492 = vld [vmem:[%s484 + $0x38] sm:$0xff]
    %v493 = vld [vmem:[%s484 + $0x40] sm:$0xff]
    %v494 = vld [vmem:[%s484 + $0x48] sm:$0xff]
    %v495 = vld [vmem:[%s484 + $0x50] sm:$0xff]
    %v496 = vld [vmem:[%s484 + $0x58] sm:$0xff]
    %v497 = vld [vmem:[%s484 + $0x60] sm:$0xff]
    %v498 = vld [vmem:[%s484 + $0x68] sm:$0xff]
    %v499 = vld [vmem:[%s484 + $0x70] sm:$0xff]
    %v500 = vld [vmem:[%s484 + $0x78] sm:$0xff]
    %v501 = vlaneseq
    %v502 = vshrl.u32 %v501, 7
    %v503 = vsub.s32 2, %v502
    %v504 = vrot.slane %v35, %v503
    %505 = vmatprep.subr.mxu0 0.0
    %506 = vmatpush1.msra.mxu0 %v500
    %507 = vmatprep.subr.mxu0 0.0
    %508 = vmatpush1.msra.mxu0 %v499
    %509 = vmatprep.subr.mxu0 0.0
    %510 = vmatpush1.msra.mxu0 %v498
    %511 = vmatprep.subr.mxu0 0.0
    %512 = vmatpush1.msra.mxu0 %v497
    %513 = vmatprep.subr.mxu0 0.0
    %514 = vmatpush1.msra.mxu0 %v496
    %515 = vmatprep.subr.mxu0 0.0
    %516 = vmatpush1.msra.mxu0 %v495
    %517 = vmatprep.subr.mxu0 0.0
    %518 = vmatpush1.msra.mxu0 %v494
    %519 = vmatprep.subr.mxu0 0.0
    %520 = vmatpush1.msra.mxu0 %v493
    %521 = vmatprep.subr.mxu0 0.0
    %522 = vmatpush1.msra.mxu0 %v492
    %523 = vmatprep.subr.mxu0 0.0
    %524 = vmatpush1.msra.mxu0 %v491
    %525 = vmatprep.subr.mxu0 0.0
    %526 = vmatpush1.msra.mxu0 %v490
    %527 = vmatprep.subr.mxu0 0.0
    %528 = vmatpush1.msra.mxu0 %v489
    %529 = vmatprep.subr.mxu0 0.0
    %530 = vmatpush1.msra.mxu0 %v488
    %531 = vmatprep.subr.mxu0 0.0
    %532 = vmatpush1.msra.mxu0 %v487
    %533 = vmatprep.subr.mxu0 0.0
    %534 = vmatpush1.msra.mxu0 %v486
    %535 = vmatprep.subr.mxu0 0.0
    %536 = vmatpush1.msra.mxu0 %v485
    %537 = vmatprep.subr.mxu0 0.0
    %538 = vmatpush2.msra.mxu0 0.0
    %539 = vmatprep.subr.mxu0 0.0
    %540 = vmatpush2.msra.mxu0 0.0
    %541 = vmatprep.subr.mxu0 0.0
    %542 = vmatpush2.msra.mxu0 0.0
    %543 = vmatprep.subr.mxu0 0.0
    %544 = vmatpush2.msra.mxu0 0.0
    %545 = vmatprep.subr.mxu0 0.0
    %546 = vmatpush2.msra.mxu0 0.0
    %547 = vmatprep.subr.mxu0 0.0
    %548 = vmatpush2.msra.mxu0 0.0
    %549 = vmatprep.subr.mxu0 0.0
    %550 = vmatpush2.msra.mxu0 0.0
    %551 = vmatprep.subr.mxu0 0.0
    %552 = vmatpush2.msra.mxu0 0.0
    %553 = vmatprep.subr.mxu0 0.0
    %554 = vmatpush2.msra.mxu0 0.0
    %555 = vmatprep.subr.mxu0 0.0
    %556 = vmatpush2.msra.mxu0 0.0
    %557 = vmatprep.subr.mxu0 0.0
    %558 = vmatpush2.msra.mxu0 0.0
    %559 = vmatprep.subr.mxu0 0.0
    %560 = vmatpush2.msra.mxu0 0.0
    %561 = vmatprep.subr.mxu0 0.0
    %562 = vmatpush2.msra.mxu0 0.0
    %563 = vmatprep.subr.mxu0 0.0
    %564 = vmatpush2.msra.mxu0 0.0
    %565 = vmatprep.subr.mxu0 0.0
    %566 = vmatpush2.msra.mxu0 0.0
    %567 = vmatprep.subr.mxu0 0.0
    %568 = vmatpush2.msra.mxu0 0.0
    %569 = vmatprep.mubr.f32.mxu0 0.0
    %570 = vmatmul.mubr.f32.gmra.mxu0 %v468
    %v571 = vpop.f32.mrf.mxu0
    %v572 = vadd.f32 %v504, %v571
    %v573 = vpop.f32.mrf.mxu0
    %574 = vmatprep.mubr.f32.mxu0 0.0
    %575 = vmatmul.mubr.f32.gmra.mxu0 %v469
    %v576 = vpop.f32.mrf.mxu0
    %v577 = vadd.f32 %v504, %v576
    %v578 = vpop.f32.mrf.mxu0
    %579 = vmatprep.mubr.f32.mxu0 0.0
    %580 = vmatmul.mubr.f32.gmra.mxu0 %v470
    %v581 = vpop.f32.mrf.mxu0
    %v582 = vadd.f32 %v504, %v581
    %v583 = vpop.f32.mrf.mxu0
    %584 = vmatprep.mubr.f32.mxu0 0.0
    %585 = vmatmul.mubr.f32.gmra.mxu0 %v471
    %v586 = vpop.f32.mrf.mxu0
    %v587 = vadd.f32 %v504, %v586
    %v588 = vpop.f32.mrf.mxu0
    %589 = vmatprep.mubr.f32.mxu0 0.0
    %590 = vmatmul.mubr.f32.gmra.mxu0 %v472
    %v591 = vpop.f32.mrf.mxu0
    %v592 = vadd.f32 %v504, %v591
    %v593 = vpop.f32.mrf.mxu0
    %594 = vmatprep.mubr.f32.mxu0 0.0
    %595 = vmatmul.mubr.f32.gmra.mxu0 %v473
    %v596 = vpop.f32.mrf.mxu0
    %v597 = vadd.f32 %v504, %v596
    %v598 = vpop.f32.mrf.mxu0
    %599 = vmatprep.mubr.f32.mxu0 0.0
    %600 = vmatmul.mubr.f32.gmra.mxu0 %v474
    %v601 = vpop.f32.mrf.mxu0
    %v602 = vadd.f32 %v504, %v601
    %v603 = vpop.f32.mrf.mxu0
    %604 = vmatprep.mubr.f32.mxu0 0.0
    %605 = vmatmul.mubr.f32.gmra.mxu0 %v475
    %v606 = vpop.f32.mrf.mxu0
    %v607 = vadd.f32 %v504, %v606
    %v608 = vpop.f32.mrf.mxu0
    %609 = vmatprep.mubr.f32.mxu0 0.0
    %610 = vmatmul.mubr.f32.gmra.mxu0 %v476
    %v611 = vpop.f32.mrf.mxu0
    %v612 = vadd.f32 %v504, %v611
    %v613 = vpop.f32.mrf.mxu0
    %614 = vmatprep.mubr.f32.mxu0 0.0
    %615 = vmatmul.mubr.f32.gmra.mxu0 %v477
    %v616 = vpop.f32.mrf.mxu0
    %v617 = vadd.f32 %v504, %v616
    %v618 = vpop.f32.mrf.mxu0
    %619 = vmatprep.mubr.f32.mxu0 0.0
    %620 = vmatmul.mubr.f32.gmra.mxu0 %v478
    %v621 = vpop.f32.mrf.mxu0
    %v622 = vadd.f32 %v504, %v621
    %v623 = vpop.f32.mrf.mxu0
    %624 = vmatprep.mubr.f32.mxu0 0.0
    %625 = vmatmul.mubr.f32.gmra.mxu0 %v479
    %v626 = vpop.f32.mrf.mxu0
    %v627 = vadd.f32 %v504, %v626
    %v628 = vpop.f32.mrf.mxu0
    %629 = vmatprep.mubr.f32.mxu0 0.0
    %630 = vmatmul.mubr.f32.gmra.mxu0 %v480
    %v631 = vpop.f32.mrf.mxu0
    %v632 = vadd.f32 %v504, %v631
    %v633 = vpop.f32.mrf.mxu0
    %634 = vmatprep.mubr.f32.mxu0 0.0
    %635 = vmatmul.mubr.f32.gmra.mxu0 %v481
    %v636 = vpop.f32.mrf.mxu0
    %v637 = vadd.f32 %v504, %v636
    %v638 = vpop.f32.mrf.mxu0
    %639 = vmatprep.mubr.f32.mxu0 0.0
    %640 = vmatmul.mubr.f32.gmra.mxu0 %v482
    %v641 = vpop.f32.mrf.mxu0
    %v642 = vadd.f32 %v504, %v641
    %v643 = vpop.f32.mrf.mxu0
    %644 = vmatprep.mubr.f32.mxu0 0.0
    %645 = vmatmul.mubr.f32.gmra.mxu0 %v483
    %v646 = vpop.f32.mrf.mxu0
    %v647 = vadd.f32 %v504, %v646
    %v648 = vpop.f32.mrf.mxu0
    %649 = vdwg.mxu0
    %v650 = vmul.f32 %v572, 0.01
    %v651 = vmul.f32 %v577, 0.01
    %v652 = vmul.f32 %v582, 0.01
    %v653 = vmul.f32 %v587, 0.01
    %v654 = vmul.f32 %v592, 0.01
    %v655 = vmul.f32 %v597, 0.01
    %v656 = vmul.f32 %v602, 0.01
    %v657 = vmul.f32 %v607, 0.01
    %v658 = vmul.f32 %v612, 0.01
    %v659 = vmul.f32 %v617, 0.01
    %v660 = vmul.f32 %v622, 0.01
    %v661 = vmul.f32 %v627, 0.01
    %v662 = vmul.f32 %v632, 0.01
    %v663 = vmul.f32 %v637, 0.01
    %v664 = vmul.f32 %v642, 0.01
    %v665 = vmul.f32 %v647, 0.01
    %v666 = vmax.f32 %v572, %v650
    %v667 = vmax.f32 %v577, %v651
    %v668 = vmax.f32 %v582, %v652
    %v669 = vmax.f32 %v587, %v653
    %v670 = vmax.f32 %v592, %v654
    %v671 = vmax.f32 %v597, %v655
    %v672 = vmax.f32 %v602, %v656
    %v673 = vmax.f32 %v607, %v657
    %v674 = vmax.f32 %v612, %v658
    %v675 = vmax.f32 %v617, %v659
    %v676 = vmax.f32 %v622, %v660
    %v677 = vmax.f32 %v627, %v661
    %v678 = vmax.f32 %v632, %v662
    %v679 = vmax.f32 %v637, %v663
    %v680 = vmax.f32 %v642, %v664
    %v681 = vmax.f32 %v647, %v665
    %s682 = scalar_lea.vmem [#allocation2], 256
    %v683 = vld [vmem:[%s682] sm:$0xff]
    %v684 = vld [vmem:[%s682 + $0x8] sm:$0xff]
    %v685 = vld [vmem:[%s682 + $0x10] sm:$0xff]
    %v686 = vld [vmem:[%s682 + $0x18] sm:$0xff]
    %v687 = vld [vmem:[%s682 + $0x20] sm:$0xff]
    %v688 = vld [vmem:[%s682 + $0x28] sm:$0xff]
    %v689 = vld [vmem:[%s682 + $0x30] sm:$0xff]
    %v690 = vld [vmem:[%s682 + $0x38] sm:$0xff]
    %v691 = vld [vmem:[%s682 + $0x40] sm:$0xff]
    %v692 = vld [vmem:[%s682 + $0x48] sm:$0xff]
    %v693 = vld [vmem:[%s682 + $0x50] sm:$0xff]
    %v694 = vld [vmem:[%s682 + $0x58] sm:$0xff]
    %v695 = vld [vmem:[%s682 + $0x60] sm:$0xff]
    %v696 = vld [vmem:[%s682 + $0x68] sm:$0xff]
    %v697 = vld [vmem:[%s682 + $0x70] sm:$0xff]
    %v698 = vld [vmem:[%s682 + $0x78] sm:$0xff]
    %v699 = vlaneseq
    %v700 = vshrl.u32 %v699, 7
    %v701 = vsub.s32 3, %v700
    %v702 = vrot.slane %v35, %v701
    %703 = vmatprep.subr.mxu0 0.0
    %704 = vmatpush1.msra.mxu0 %v698
    %705 = vmatprep.subr.mxu0 0.0
    %706 = vmatpush1.msra.mxu0 %v697
    %707 = vmatprep.subr.mxu0 0.0
    %708 = vmatpush1.msra.mxu0 %v696
    %709 = vmatprep.subr.mxu0 0.0
    %710 = vmatpush1.msra.mxu0 %v695
    %711 = vmatprep.subr.mxu0 0.0
    %712 = vmatpush1.msra.mxu0 %v694
    %713 = vmatprep.subr.mxu0 0.0
    %714 = vmatpush1.msra.mxu0 %v693
    %715 = vmatprep.subr.mxu0 0.0
    %716 = vmatpush1.msra.mxu0 %v692
    %717 = vmatprep.subr.mxu0 0.0
    %718 = vmatpush1.msra.mxu0 %v691
    %719 = vmatprep.subr.mxu0 0.0
    %720 = vmatpush1.msra.mxu0 %v690
    %721 = vmatprep.subr.mxu0 0.0
    %722 = vmatpush1.msra.mxu0 %v689
    %723 = vmatprep.subr.mxu0 0.0
    %724 = vmatpush1.msra.mxu0 %v688
    %725 = vmatprep.subr.mxu0 0.0
    %726 = vmatpush1.msra.mxu0 %v687
    %727 = vmatprep.subr.mxu0 0.0
    %728 = vmatpush1.msra.mxu0 %v686
    %729 = vmatprep.subr.mxu0 0.0
    %730 = vmatpush1.msra.mxu0 %v685
    %731 = vmatprep.subr.mxu0 0.0
    %732 = vmatpush1.msra.mxu0 %v684
    %733 = vmatprep.subr.mxu0 0.0
    %734 = vmatpush1.msra.mxu0 %v683
    %735 = vmatprep.subr.mxu0 0.0
    %736 = vmatpush2.msra.mxu0 0.0
    %737 = vmatprep.subr.mxu0 0.0
    %738 = vmatpush2.msra.mxu0 0.0
    %739 = vmatprep.subr.mxu0 0.0
    %740 = vmatpush2.msra.mxu0 0.0
    %741 = vmatprep.subr.mxu0 0.0
    %742 = vmatpush2.msra.mxu0 0.0
    %743 = vmatprep.subr.mxu0 0.0
    %744 = vmatpush2.msra.mxu0 0.0
    %745 = vmatprep.subr.mxu0 0.0
    %746 = vmatpush2.msra.mxu0 0.0
    %747 = vmatprep.subr.mxu0 0.0
    %748 = vmatpush2.msra.mxu0 0.0
    %749 = vmatprep.subr.mxu0 0.0
    %750 = vmatpush2.msra.mxu0 0.0
    %751 = vmatprep.subr.mxu0 0.0
    %752 = vmatpush2.msra.mxu0 0.0
    %753 = vmatprep.subr.mxu0 0.0
    %754 = vmatpush2.msra.mxu0 0.0
    %755 = vmatprep.subr.mxu0 0.0
    %756 = vmatpush2.msra.mxu0 0.0
    %757 = vmatprep.subr.mxu0 0.0
    %758 = vmatpush2.msra.mxu0 0.0
    %759 = vmatprep.subr.mxu0 0.0
    %760 = vmatpush2.msra.mxu0 0.0
    %761 = vmatprep.subr.mxu0 0.0
    %762 = vmatpush2.msra.mxu0 0.0
    %763 = vmatprep.subr.mxu0 0.0
    %764 = vmatpush2.msra.mxu0 0.0
    %765 = vmatprep.subr.mxu0 0.0
    %766 = vmatpush2.msra.mxu0 0.0
    %767 = vmatprep.mubr.f32.mxu0 0.0
    %768 = vmatmul.mubr.f32.gmra.mxu0 %v666
    %v769 = vpop.f32.mrf.mxu0
    %v770 = vadd.f32 %v702, %v769
    %v771 = vpop.f32.mrf.mxu0
    %772 = vmatprep.mubr.f32.mxu0 0.0
    %773 = vmatmul.mubr.f32.gmra.mxu0 %v667
    %v774 = vpop.f32.mrf.mxu0
    %v775 = vadd.f32 %v702, %v774
    %v776 = vpop.f32.mrf.mxu0
    %777 = vmatprep.mubr.f32.mxu0 0.0
    %778 = vmatmul.mubr.f32.gmra.mxu0 %v668
    %v779 = vpop.f32.mrf.mxu0
    %v780 = vadd.f32 %v702, %v779
    %v781 = vpop.f32.mrf.mxu0
    %782 = vmatprep.mubr.f32.mxu0 0.0
    %783 = vmatmul.mubr.f32.gmra.mxu0 %v669
    %v784 = vpop.f32.mrf.mxu0
    %v785 = vadd.f32 %v702, %v784
    %v786 = vpop.f32.mrf.mxu0
    %787 = vmatprep.mubr.f32.mxu0 0.0
    %788 = vmatmul.mubr.f32.gmra.mxu0 %v670
    %v789 = vpop.f32.mrf.mxu0
    %v790 = vadd.f32 %v702, %v789
    %v791 = vpop.f32.mrf.mxu0
    %792 = vmatprep.mubr.f32.mxu0 0.0
    %793 = vmatmul.mubr.f32.gmra.mxu0 %v671
    %v794 = vpop.f32.mrf.mxu0
    %v795 = vadd.f32 %v702, %v794
    %v796 = vpop.f32.mrf.mxu0
    %797 = vmatprep.mubr.f32.mxu0 0.0
    %798 = vmatmul.mubr.f32.gmra.mxu0 %v672
    %v799 = vpop.f32.mrf.mxu0
    %v800 = vadd.f32 %v702, %v799
    %v801 = vpop.f32.mrf.mxu0
    %802 = vmatprep.mubr.f32.mxu0 0.0
    %803 = vmatmul.mubr.f32.gmra.mxu0 %v673
    %v804 = vpop.f32.mrf.mxu0
    %v805 = vadd.f32 %v702, %v804
    %v806 = vpop.f32.mrf.mxu0
    %807 = vmatprep.mubr.f32.mxu0 0.0
    %808 = vmatmul.mubr.f32.gmra.mxu0 %v674
    %v809 = vpop.f32.mrf.mxu0
    %v810 = vadd.f32 %v702, %v809
    %v811 = vpop.f32.mrf.mxu0
    %812 = vmatprep.mubr.f32.mxu0 0.0
    %813 = vmatmul.mubr.f32.gmra.mxu0 %v675
    %v814 = vpop.f32.mrf.mxu0
    %v815 = vadd.f32 %v702, %v814
    %v816 = vpop.f32.mrf.mxu0
    %817 = vmatprep.mubr.f32.mxu0 0.0
    %818 = vmatmul.mubr.f32.gmra.mxu0 %v676
    %v819 = vpop.f32.mrf.mxu0
    %v820 = vadd.f32 %v702, %v819
    %v821 = vpop.f32.mrf.mxu0
    %822 = vmatprep.mubr.f32.mxu0 0.0
    %823 = vmatmul.mubr.f32.gmra.mxu0 %v677
    %v824 = vpop.f32.mrf.mxu0
    %v825 = vadd.f32 %v702, %v824
    %v826 = vpop.f32.mrf.mxu0
    %827 = vmatprep.mubr.f32.mxu0 0.0
    %828 = vmatmul.mubr.f32.gmra.mxu0 %v678
    %v829 = vpop.f32.mrf.mxu0
    %v830 = vadd.f32 %v702, %v829
    %v831 = vpop.f32.mrf.mxu0
    %832 = vmatprep.mubr.f32.mxu0 0.0
    %833 = vmatmul.mubr.f32.gmra.mxu0 %v679
    %v834 = vpop.f32.mrf.mxu0
    %v835 = vadd.f32 %v702, %v834
    %v836 = vpop.f32.mrf.mxu0
    %837 = vmatprep.mubr.f32.mxu0 0.0
    %838 = vmatmul.mubr.f32.gmra.mxu0 %v680
    %v839 = vpop.f32.mrf.mxu0
    %v840 = vadd.f32 %v702, %v839
    %v841 = vpop.f32.mrf.mxu0
    %842 = vmatprep.mubr.f32.mxu0 0.0
    %843 = vmatmul.mubr.f32.gmra.mxu0 %v681
    %v844 = vpop.f32.mrf.mxu0
    %v845 = vadd.f32 %v702, %v844
    %v846 = vpop.f32.mrf.mxu0
    %847 = vdwg.mxu0
    %v848 = vmul.f32 %v770, 0.01
    %v849 = vmul.f32 %v775, 0.01
    %v850 = vmul.f32 %v780, 0.01
    %v851 = vmul.f32 %v785, 0.01
    %v852 = vmul.f32 %v790, 0.01
    %v853 = vmul.f32 %v795, 0.01
    %v854 = vmul.f32 %v800, 0.01
    %v855 = vmul.f32 %v805, 0.01
    %v856 = vmul.f32 %v810, 0.01
    %v857 = vmul.f32 %v815, 0.01
    %v858 = vmul.f32 %v820, 0.01
    %v859 = vmul.f32 %v825, 0.01
    %v860 = vmul.f32 %v830, 0.01
    %v861 = vmul.f32 %v835, 0.01
    %v862 = vmul.f32 %v840, 0.01
    %v863 = vmul.f32 %v845, 0.01
    %v864 = vmax.f32 %v770, %v848
    %v865 = vmax.f32 %v775, %v849
    %v866 = vmax.f32 %v780, %v850
    %v867 = vmax.f32 %v785, %v851
    %v868 = vmax.f32 %v790, %v852
    %v869 = vmax.f32 %v795, %v853
    %v870 = vmax.f32 %v800, %v854
    %v871 = vmax.f32 %v805, %v855
    %v872 = vmax.f32 %v810, %v856
    %v873 = vmax.f32 %v815, %v857
    %v874 = vmax.f32 %v820, %v858
    %v875 = vmax.f32 %v825, %v859
    %v876 = vmax.f32 %v830, %v860
    %v877 = vmax.f32 %v835, %v861
    %v878 = vmax.f32 %v840, %v862
    %v879 = vmax.f32 %v845, %v863
    %v880 = vld [vmem:[%s3] sm:$0xff]
    %v882 = vrot.slane %v35, 4
    %s883 = vtos %v882
    %v884 = vstv %s883
    %886 = vmatprep.subr.mxu0 0.0
    %887 = vmatpush1.xpose.msra.mxu0 %v879
    %888 = vmatprep.subr.mxu0 0.0
    %889 = vmatpush1.xpose.msra.mxu0 %v878
    %890 = vmatprep.subr.mxu0 0.0
    %891 = vmatpush1.xpose.msra.mxu0 %v877
    %892 = vmatprep.subr.mxu0 0.0
    %893 = vmatpush1.xpose.msra.mxu0 %v876
    %894 = vmatprep.subr.mxu0 0.0
    %895 = vmatpush1.xpose.msra.mxu0 %v875
    %896 = vmatprep.subr.mxu0 0.0
    %897 = vmatpush1.xpose.msra.mxu0 %v874
    %898 = vmatprep.subr.mxu0 0.0
    %899 = vmatpush1.xpose.msra.mxu0 %v873
    %900 = vmatprep.subr.mxu0 0.0
    %901 = vmatpush1.xpose.msra.mxu0 %v872
    %902 = vmatprep.subr.mxu0 0.0
    %903 = vmatpush1.xpose.msra.mxu0 %v871
    %904 = vmatprep.subr.mxu0 0.0
    %905 = vmatpush1.xpose.msra.mxu0 %v870
    %906 = vmatprep.subr.mxu0 0.0
    %907 = vmatpush1.xpose.msra.mxu0 %v869
    %908 = vmatprep.subr.mxu0 0.0
    %909 = vmatpush1.xpose.msra.mxu0 %v868
    %910 = vmatprep.subr.mxu0 0.0
    %911 = vmatpush1.xpose.msra.mxu0 %v867
    %912 = vmatprep.subr.mxu0 0.0
    %913 = vmatpush1.xpose.msra.mxu0 %v866
    %914 = vmatprep.subr.mxu0 0.0
    %915 = vmatpush1.xpose.msra.mxu0 %v865
    %916 = vmatprep.subr.mxu0 0.0
    %917 = vmatpush1.xpose.msra.mxu0 %v864
    %918 = vmatprep.subr.mxu0 0.0
    %919 = vmatpush2.xpose.msra.mxu0 0.0
    %920 = vmatprep.subr.mxu0 0.0
    %921 = vmatpush2.xpose.msra.mxu0 0.0
    %922 = vmatprep.subr.mxu0 0.0
    %923 = vmatpush2.xpose.msra.mxu0 0.0
    %924 = vmatprep.subr.mxu0 0.0
    %925 = vmatpush2.xpose.msra.mxu0 0.0
    %926 = vmatprep.subr.mxu0 0.0
    %927 = vmatpush2.xpose.msra.mxu0 0.0
    %928 = vmatprep.subr.mxu0 0.0
    %929 = vmatpush2.xpose.msra.mxu0 0.0
    %930 = vmatprep.subr.mxu0 0.0
    %931 = vmatpush2.xpose.msra.mxu0 0.0
    %932 = vmatprep.subr.mxu0 0.0
    %933 = vmatpush2.xpose.msra.mxu0 0.0
    %934 = vmatprep.subr.mxu0 0.0
    %935 = vmatpush2.xpose.msra.mxu0 0.0
    %936 = vmatprep.subr.mxu0 0.0
    %937 = vmatpush2.xpose.msra.mxu0 0.0
    %938 = vmatprep.subr.mxu0 0.0
    %939 = vmatpush2.xpose.msra.mxu0 0.0
    %940 = vmatprep.subr.mxu0 0.0
    %941 = vmatpush2.xpose.msra.mxu0 0.0
    %942 = vmatprep.subr.mxu0 0.0
    %943 = vmatpush2.xpose.msra.mxu0 0.0
    %944 = vmatprep.subr.mxu0 0.0
    %945 = vmatpush2.xpose.msra.mxu0 0.0
    %946 = vmatprep.subr.mxu0 0.0
    %947 = vmatpush2.xpose.msra.mxu0 0.0
    %948 = vmatprep.subr.mxu0 0.0
    %949 = vmatpush2.xpose.msra.mxu0 0.0
    %950 = vmatprep.mubr.f32.mxu0 0.0
    %951 = vmatmul.mubr.f32.gmra.mxu0 %v880
    %v952 = vpop.f32.mrf.mxu0
    %v953 = vadd.f32 %v884, %v952
    %v954 = vpop.f32.mrf.mxu0
    %955 = vdwg.mxu0
    %956 = vst [vmem:[#allocation5] sm:$0xff] %v953
    // Predicated region
    $region26: #{tpu_custom_call.1} parent=1 // pred_check
      _
    $region27: #{tpu_custom_call.1} parent=1 // pred_check_branch
      %958 = sbr.rel (0) target = $region29
    $region28: #{tpu_custom_call.1} parent=1 // pred_region
      %s960 = ssub.s32 128, 128
      %961 = vsyncadd [#allocation4], %s960
      %s963 = sshll.u32 [#allocation5], 4
      %s964 = int_to_ptr.vmem [resolvable:$true] %s963
      %966 = dma.vmem_to_hbm [thread:$0]  %s964, 128, %s5, [#allocation4]
    $region29: #{tpu_custom_call.1} parent=1 // pred_fallthru
      _
    // Predicated region
    $region30: #{tpu_custom_call.1} parent=1 // pred_check
      _
    $region31: #{tpu_custom_call.1} parent=1 // pred_check_branch
      %968 = sbr.rel (0) target = $region33
    $region32: #{tpu_custom_call.1} parent=1 // pred_region
      %969 = dma.done [#allocation4], 128
    $region33: #{tpu_custom_call.1} parent=1 // pred_fallthru
      _
    %970 = vsyncpa [#allocation3], 1
    %971 = vsyncpa [#allocation4], 1

</llo_original>
